<compile_context>
chip_gen: v5e
topology: v5e:2x2
jax: 0.10.0
libtpu: 0.0.40
codegen_flags: <defaults>
</compile_context>

<pallas_src>
import jax
import jax.numpy as jnp
from jax.experimental import pallas as pl
from jax.experimental.pallas import tpu as pltpu


LANE = 128  # TPU lane width; pad node/feature dims to multiples of this.


def _round_up(v, m):
    return (v + m - 1) // m * m


def _pad2d(arr, rows, cols, dtype):
    """Zero-pad a 2-D array to (rows, cols) and cast to dtype."""
    out = jnp.zeros((rows, cols), dtype)
    return out.at[: arr.shape[0], : arr.shape[1]].set(arr.astype(dtype))


def _fused_gnn_kernel(a_ref, x_ref, w1_ref, b1_ref, w2_ref, b2_ref,
                      w3_ref, b3_ref, o_ref):
    """relu(A(X W1)+b1) -> relu(A(H W2)+b2) -> A(H W3)+b3, all on MXU/VPU."""
    a = a_ref[...]  # bf16 (Np, Np) — loaded from VMEM once, reused 3x.

    # ---- layer 1: relu(A @ (X @ W1) + b1) ----
    xw = jnp.dot(x_ref[...], w1_ref[...], preferred_element_type=jnp.float32)
    h = jnp.dot(a, xw.astype(jnp.bfloat16), preferred_element_type=jnp.float32)
    h = jnp.maximum(h + b1_ref[...], 0.0)

    # ---- layer 2: relu(A @ (H @ W2) + b2) ----
    xw = jnp.dot(h.astype(jnp.bfloat16), w2_ref[...],
                 preferred_element_type=jnp.float32)
    h = jnp.dot(a, xw.astype(jnp.bfloat16), preferred_element_type=jnp.float32)
    h = jnp.maximum(h + b2_ref[...], 0.0)

    # ---- layer 3: A @ (H @ W3) + b3 (no ReLU) ----
    xw = jnp.dot(h.astype(jnp.bfloat16), w3_ref[...],
                 preferred_element_type=jnp.float32)
    h = jnp.dot(a, xw.astype(jnp.bfloat16), preferred_element_type=jnp.float32)
    o_ref[...] = (h + b3_ref[...]).astype(o_ref.dtype)


def gnn_forward(a_hat, x, params):
    """Full fused GNN forward. a_hat: [N,N] normalized adjacency, x: [N,F_in]."""
    w1, b1, w2, b2, w3, b3 = params
    n = a_hat.shape[0]
    in_dim, hid_dim = w1.shape
    out_dim = w3.shape[1]

    n_p = _round_up(n, LANE)
    fin_p = _round_up(in_dim, LANE)
    hid_p = _round_up(hid_dim, LANE)
    out_p = _round_up(out_dim, LANE)

    # bf16 MXU operands, zero-padded to lane-dense shapes.
    a_p = _pad2d(a_hat, n_p, n_p, jnp.bfloat16)
    x_p = _pad2d(x, n_p, fin_p, jnp.bfloat16)
    w1_p = _pad2d(w1, fin_p, hid_p, jnp.bfloat16)
    w2_p = _pad2d(w2, hid_p, hid_p, jnp.bfloat16)
    w3_p = _pad2d(w3, hid_p, out_p, jnp.bfloat16)
    # Biases stay f32 for the epilogue; padded lanes are zero.
    b1_p = _pad2d(b1.reshape(1, -1), 1, hid_p, jnp.float32)
    b2_p = _pad2d(b2.reshape(1, -1), 1, hid_p, jnp.float32)
    b3_p = _pad2d(b3.reshape(1, -1), 1, out_p, jnp.float32)

    # VMEM budget: (double-buffered) inputs + output + f32 intermediates.
    in_bytes = (a_p.size + x_p.size + w1_p.size + w2_p.size + w3_p.size) * 2 \
               + (b1_p.size + b2_p.size + b3_p.size) * 4
    out_bytes = n_p * out_p * 4
    interm_bytes = 2 * n_p * hid_p * 4
    vmem_limit = int(min(48 << 20,
                         max(32 << 20,
                             2 * (in_bytes + out_bytes) + interm_bytes + (4 << 20))))

    flops = 2 * n_p * n_p * (2 * hid_p + out_p)                       # 3x A @ (XW)
    flops += 2 * n_p * (fin_p * hid_p + hid_p * hid_p + hid_p * out_p)  # 3x X @ W
    bytes_accessed = in_bytes + out_bytes

    def full_spec(shape):
        return pl.BlockSpec(shape, lambda i: (0, 0))

    out_padded = pl.pallas_call(
        _fused_gnn_kernel,
        out_shape=jax.ShapeDtypeStruct((n_p, out_p), jnp.float32),
        grid_spec=pltpu.PrefetchScalarGridSpec(
            num_scalar_prefetch=0,
            grid=(1,),
            in_specs=[
                full_spec((n_p, n_p)),      # A_hat
                full_spec((n_p, fin_p)),    # X
                full_spec((fin_p, hid_p)),  # W1
                full_spec((1, hid_p)),      # b1
                full_spec((hid_p, hid_p)),  # W2
                full_spec((1, hid_p)),      # b2
                full_spec((hid_p, out_p)),  # W3
                full_spec((1, out_p)),      # b3
            ],
            out_specs=full_spec((n_p, out_p)),
        ),
        compiler_params=pltpu.CompilerParams(
            dimension_semantics=("arbitrary",),
            vmem_limit_bytes=vmem_limit,
        ),
        cost_estimate=pl.CostEstimate(
            flops=flops, transcendentals=0, bytes_accessed=bytes_accessed),
    )(a_p, x_p, w1_p, b1_p, w2_p, b2_p, w3_p, b3_p)

    # Slice off node/feature padding.
    return out_padded[:n, :out_dim]


def make_normalized_adjacency(adj):
    """A_hat = D^{-1/2} A D^{-1/2} (plain-JAX graph preprocessing glue)."""
    deg = jnp.sum(adj, axis=1)
    d_inv_sqrt = jnp.where(deg > 0, 1.0 / jnp.sqrt(deg), 0.0)
    return adj * d_inv_sqrt[:, None] * d_inv_sqrt[None, :]


def init_params(key, in_dim, hid_dim, out_dim):
    """Deterministic Glorot-uniform-style init for the three GraphConv layers."""
    k1, k2, k3 = jax.random.split(key, 3)

    def glorot(k, fan_in, fan_out):
        limit = jnp.sqrt(6.0 / (fan_in + fan_out))
        return jax.random.uniform(
            k, (fan_in, fan_out), jnp.float32, minval=-limit, maxval=limit
        )

    w1 = glorot(k1, in_dim, hid_dim)
    b1 = jnp.zeros((hid_dim,), jnp.float32)
    w2 = glorot(k2, hid_dim, hid_dim)
    b2 = jnp.zeros((hid_dim,), jnp.float32)
    w3 = glorot(k3, hid_dim, out_dim)
    b3 = jnp.zeros((out_dim,), jnp.float32)
    return (w1, b1, w2, b2, w3, b3)


if __name__ == "__main__":
    # Small, deterministic example: 16 nodes, in_dim=16, hid_dim=32, out_dim=8.
    N, IN_DIM, HID_DIM, OUT_DIM = 16, 16, 32, 8

    key = jax.random.PRNGKey(0)
    k_adj, k_x, k_params = jax.random.split(key, 3)

    # Random undirected graph with self-loops (avoids zero in-degree).
    rand = jax.random.uniform(k_adj, (N, N))
    adj = (rand < 0.3).astype(jnp.float32)
    adj = jnp.maximum(adj, adj.T)                           # symmetrize
    adj = jnp.maximum(adj, jnp.eye(N, dtype=jnp.float32))   # self-loops
    a_hat = make_normalized_adjacency(adj)

    x = jax.random.normal(k_x, (N, IN_DIM), jnp.float32)
    params = init_params(k_params, IN_DIM, HID_DIM, OUT_DIM)

    fused = jax.jit(gnn_forward)
    out = fused(a_hat, x, params)
    out = jax.block_until_ready(out)

    # Pure-JAX reference doing the same math with bf16 MXU inputs / f32 accum.
    def ref_forward(a_hat, x, params):
        w1, b1, w2, b2, w3, b3 = params
        a = a_hat.astype(jnp.bfloat16)

        def layer(h, w, b, relu):
            xw = jnp.dot(h.astype(jnp.bfloat16), w.astype(jnp.bfloat16),
                         preferred_element_type=jnp.float32)
            y = jnp.dot(a, xw.astype(jnp.bfloat16),
                        preferred_element_type=jnp.float32) + b
            return jnp.maximum(y, 0.0) if relu else y

        h = layer(x, w1, b1, True)
        h = layer(h, w2, b2, True)
        return layer(h, w3, b3, False)

    out_ref = ref_forward(a_hat, x, params)
    assert out.shape == (N, OUT_DIM)
    assert jnp.allclose(out, out_ref, atol=2e-3, rtol=2e-3), (
        float(jnp.max(jnp.abs(out - out_ref))))

    print("KERNEL_OK")
</pallas_src>

<mosaic_0001>
module attributes {stable_mosaic.version = 11 : i64} {
  func.func @_fused_gnn_kernel(%arg0: i32, %arg1: memref<128x128xbf16, #tpu.memory_space<vmem>>, %arg2: memref<128x128xbf16, #tpu.memory_space<vmem>>, %arg3: memref<128x128xbf16, #tpu.memory_space<vmem>>, %arg4: memref<1x128xf32, #tpu.memory_space<vmem>>, %arg5: memref<128x128xbf16, #tpu.memory_space<vmem>>, %arg6: memref<1x128xf32, #tpu.memory_space<vmem>>, %arg7: memref<128x128xbf16, #tpu.memory_space<vmem>>, %arg8: memref<1x128xf32, #tpu.memory_space<vmem>>, %arg9: memref<128x128xf32, #tpu.memory_space<vmem>>) attributes {dimension_semantics = [#tpu.dimension_semantics<arbitrary>], iteration_bounds = array<i64: 1>, scalar_prefetch = 0 : i64, scratch_operands = 0 : i64, tpu.core_type = #tpu.core_type<tc>, window_params = [{pipeline_mode = #tpu.pipeline_mode<synchronous>, transform_indices = @transform_0, window_bounds = array<i64: 128, 128>}, {pipeline_mode = #tpu.pipeline_mode<synchronous>, transform_indices = @transform_1, window_bounds = array<i64: 128, 128>}, {pipeline_mode = #tpu.pipeline_mode<synchronous>, transform_indices = @transform_2, window_bounds = array<i64: 128, 128>}, {pipeline_mode = #tpu.pipeline_mode<synchronous>, transform_indices = @transform_3, window_bounds = array<i64: 1, 128>}, {pipeline_mode = #tpu.pipeline_mode<synchronous>, transform_indices = @transform_4, window_bounds = array<i64: 128, 128>}, {pipeline_mode = #tpu.pipeline_mode<synchronous>, transform_indices = @transform_5, window_bounds = array<i64: 1, 128>}, {pipeline_mode = #tpu.pipeline_mode<synchronous>, transform_indices = @transform_6, window_bounds = array<i64: 128, 128>}, {pipeline_mode = #tpu.pipeline_mode<synchronous>, transform_indices = @transform_7, window_bounds = array<i64: 1, 128>}, {pipeline_mode = #tpu.pipeline_mode<synchronous>, transform_indices = @transform_8, window_bounds = array<i64: 128, 128>}]} {
    %c0 = arith.constant 0 : index
    %c0_0 = arith.constant 0 : index
    %0 = vector.load %arg1[%c0, %c0_0] : memref<128x128xbf16, #tpu.memory_space<vmem>>, vector<128x128xbf16>
    %c0_1 = arith.constant 0 : index
    %c0_2 = arith.constant 0 : index
    %1 = vector.load %arg2[%c0_1, %c0_2] : memref<128x128xbf16, #tpu.memory_space<vmem>>, vector<128x128xbf16>
    %c0_3 = arith.constant 0 : index
    %c0_4 = arith.constant 0 : index
    %2 = vector.load %arg3[%c0_3, %c0_4] : memref<128x128xbf16, #tpu.memory_space<vmem>>, vector<128x128xbf16>
    %cst = arith.constant dense<0.000000e+00> : vector<128x128xf32>
    %3 = tpu.matmul %1, %2, %cst {dimension_numbers = #tpu.dot_dimension_numbers<[1], [0], [0], [1], [0, 0, 1, 1], [], []>} : vector<128x128xbf16>, vector<128x128xbf16>, vector<128x128xf32> -> vector<128x128xf32>
    %4 = arith.truncf %3 : vector<128x128xf32> to vector<128x128xbf16>
    %cst_5 = arith.constant dense<0.000000e+00> : vector<128x128xf32>
    %5 = tpu.matmul %0, %4, %cst_5 {dimension_numbers = #tpu.dot_dimension_numbers<[1], [0], [0], [1], [0, 0, 1, 1], [], []>} : vector<128x128xbf16>, vector<128x128xbf16>, vector<128x128xf32> -> vector<128x128xf32>
    %c0_6 = arith.constant 0 : index
    %c0_7 = arith.constant 0 : index
    %6 = vector.load %arg4[%c0_6, %c0_7] : memref<1x128xf32, #tpu.memory_space<vmem>>, vector<1x128xf32>
    %7 = vector.broadcast %6 : vector<1x128xf32> to vector<128x128xf32>
    %8 = arith.addf %5, %7 : vector<128x128xf32>
    %cst_8 = arith.constant 0.000000e+00 : f32
    %9 = vector.broadcast %cst_8 : f32 to vector<128x128xf32>
    %10 = arith.maximumf %8, %9 : vector<128x128xf32>
    %11 = arith.truncf %10 : vector<128x128xf32> to vector<128x128xbf16>
    %c0_9 = arith.constant 0 : index
    %c0_10 = arith.constant 0 : index
    %12 = vector.load %arg5[%c0_9, %c0_10] : memref<128x128xbf16, #tpu.memory_space<vmem>>, vector<128x128xbf16>
    %cst_11 = arith.constant dense<0.000000e+00> : vector<128x128xf32>
    %13 = tpu.matmul %11, %12, %cst_11 {dimension_numbers = #tpu.dot_dimension_numbers<[1], [0], [0], [1], [0, 0, 1, 1], [], []>} : vector<128x128xbf16>, vector<128x128xbf16>, vector<128x128xf32> -> vector<128x128xf32>
    %14 = arith.truncf %13 : vector<128x128xf32> to vector<128x128xbf16>
    %cst_12 = arith.constant dense<0.000000e+00> : vector<128x128xf32>
    %15 = tpu.matmul %0, %14, %cst_12 {dimension_numbers = #tpu.dot_dimension_numbers<[1], [0], [0], [1], [0, 0, 1, 1], [], []>} : vector<128x128xbf16>, vector<128x128xbf16>, vector<128x128xf32> -> vector<128x128xf32>
    %c0_13 = arith.constant 0 : index
    %c0_14 = arith.constant 0 : index
    %16 = vector.load %arg6[%c0_13, %c0_14] : memref<1x128xf32, #tpu.memory_space<vmem>>, vector<1x128xf32>
    %17 = vector.broadcast %16 : vector<1x128xf32> to vector<128x128xf32>
    %18 = arith.addf %15, %17 : vector<128x128xf32>
    %cst_15 = arith.constant 0.000000e+00 : f32
    %19 = vector.broadcast %cst_15 : f32 to vector<128x128xf32>
    %20 = arith.maximumf %18, %19 : vector<128x128xf32>
    %21 = arith.truncf %20 : vector<128x128xf32> to vector<128x128xbf16>
    %c0_16 = arith.constant 0 : index
    %c0_17 = arith.constant 0 : index
    %22 = vector.load %arg7[%c0_16, %c0_17] : memref<128x128xbf16, #tpu.memory_space<vmem>>, vector<128x128xbf16>
    %cst_18 = arith.constant dense<0.000000e+00> : vector<128x128xf32>
    %23 = tpu.matmul %21, %22, %cst_18 {dimension_numbers = #tpu.dot_dimension_numbers<[1], [0], [0], [1], [0, 0, 1, 1], [], []>} : vector<128x128xbf16>, vector<128x128xbf16>, vector<128x128xf32> -> vector<128x128xf32>
    %24 = arith.truncf %23 : vector<128x128xf32> to vector<128x128xbf16>
    %cst_19 = arith.constant dense<0.000000e+00> : vector<128x128xf32>
    %25 = tpu.matmul %0, %24, %cst_19 {dimension_numbers = #tpu.dot_dimension_numbers<[1], [0], [0], [1], [0, 0, 1, 1], [], []>} : vector<128x128xbf16>, vector<128x128xbf16>, vector<128x128xf32> -> vector<128x128xf32>
    %c0_20 = arith.constant 0 : index
    %c0_21 = arith.constant 0 : index
    %26 = vector.load %arg8[%c0_20, %c0_21] : memref<1x128xf32, #tpu.memory_space<vmem>>, vector<1x128xf32>
    %27 = vector.broadcast %26 : vector<1x128xf32> to vector<128x128xf32>
    %28 = arith.addf %25, %27 : vector<128x128xf32>
    %c0_22 = arith.constant 0 : index
    %c0_23 = arith.constant 0 : index
    %29 = vector.load %arg9[%c0_22, %c0_23] : memref<128x128xf32, #tpu.memory_space<vmem>>, vector<128x128xf32>
    tpu.vector_store %arg9[%c0_22, %c0_23], %28 {strides = array<i32>} : memref<128x128xf32, #tpu.memory_space<vmem>>, vector<128x128xf32>,
    return
  }
  func.func @transform_0(%arg0: i32) -> (i32, i32) {
    %c0_i32 = arith.constant 0 : i32
    %c0_i32_0 = arith.constant 0 : i32
    %c0_i32_1 = arith.constant 0 : i32
    return %c0_i32, %c0_i32_0 : i32, i32
  }
  func.func @transform_1(%arg0: i32) -> (i32, i32) {
    %c0_i32 = arith.constant 0 : i32
    %c0_i32_0 = arith.constant 0 : i32
    %c0_i32_1 = arith.constant 0 : i32
    return %c0_i32, %c0_i32_0 : i32, i32
  }
  func.func @transform_2(%arg0: i32) -> (i32, i32) {
    %c0_i32 = arith.constant 0 : i32
    %c0_i32_0 = arith.constant 0 : i32
    %c0_i32_1 = arith.constant 0 : i32
    return %c0_i32, %c0_i32_0 : i32, i32
  }
  func.func @transform_3(%arg0: i32) -> (i32, i32) {
    %c0_i32 = arith.constant 0 : i32
    %c0_i32_0 = arith.constant 0 : i32
    %c0_i32_1 = arith.constant 0 : i32
    return %c0_i32, %c0_i32_0 : i32, i32
  }
  func.func @transform_4(%arg0: i32) -> (i32, i32) {
    %c0_i32 = arith.constant 0 : i32
    %c0_i32_0 = arith.constant 0 : i32
    %c0_i32_1 = arith.constant 0 : i32
    return %c0_i32, %c0_i32_0 : i32, i32
  }
  func.func @transform_5(%arg0: i32) -> (i32, i32) {
    %c0_i32 = arith.constant 0 : i32
    %c0_i32_0 = arith.constant 0 : i32
    %c0_i32_1 = arith.constant 0 : i32
    return %c0_i32, %c0_i32_0 : i32, i32
  }
  func.func @transform_6(%arg0: i32) -> (i32, i32) {
    %c0_i32 = arith.constant 0 : i32
    %c0_i32_0 = arith.constant 0 : i32
    %c0_i32_1 = arith.constant 0 : i32
    return %c0_i32, %c0_i32_0 : i32, i32
  }
  func.func @transform_7(%arg0: i32) -> (i32, i32) {
    %c0_i32 = arith.constant 0 : i32
    %c0_i32_0 = arith.constant 0 : i32
    %c0_i32_1 = arith.constant 0 : i32
    return %c0_i32, %c0_i32_0 : i32, i32
  }
  func.func @transform_8(%arg0: i32) -> (i32, i32) {
    %c0_i32 = arith.constant 0 : i32
    %c0_i32_0 = arith.constant 0 : i32
    %c0_i32_1 = arith.constant 0 : i32
    return %c0_i32, %c0_i32_0 : i32, i32
  }
}

</mosaic_0001>

<llo_original>
// kernel: gnn_forward.1
$region0: #{gnn_forward.1}
  #allocation0 [shape = 'u32[]', space=smem, size = 0x4, offset = 0x4, fixed_abs, tag = 'smem constant byte address 0x4 - core index']
  #allocation1 [shape = 'u32[72,128]{1,0:T(1,128)}', space=vmem, size = 0x9000, scoped, tag = 'internal scratch']
  %s0 = inlined_call_operand.vmem [shape: bf16[128,128], index: 0, kind: input, shape index: {}]
  %s1 = inlined_call_operand.vmem [shape: bf16[128,128], index: 1, kind: input, shape index: {}]
  %s2 = inlined_call_operand.vmem [shape: bf16[128,128], index: 2, kind: input, shape index: {}]
  %s3 = inlined_call_operand.vmem [shape: f32[1,128], index: 3, kind: input, shape index: {}]
  %s4 = inlined_call_operand.vmem [shape: bf16[128,128], index: 4, kind: input, shape index: {}]
  %s5 = inlined_call_operand.vmem [shape: f32[1,128], index: 5, kind: input, shape index: {}]
  %s6 = inlined_call_operand.vmem [shape: bf16[128,128], index: 6, kind: input, shape index: {}]
  %s7 = inlined_call_operand.vmem [shape: f32[1,128], index: 7, kind: input, shape index: {}]
  %s8 = inlined_call_operand.vmem [shape: f32[128,128], index: 8, kind: output, shape index: {}]
  %s9 = sld [smem:[#allocation0]]
  $region42: #{gnn_forward.1} parent=0
    _
  %s11 = ssub.s32 1, %s9
  %s12 = scalar_select 0, %s11, %s9
  // Predicated region
  $region2: #{gnn_forward.1} parent=0 // pred_check
    _
  $region3: #{gnn_forward.1} parent=0 // pred_check_branch
    %14 = sbr.rel (0) target = $region5
  $region4: #{gnn_forward.1} parent=0 // pred_region
    _
  $region5: #{gnn_forward.1} parent=0 // pred_fallthru
    _
  // Predicated region
  $region6: #{gnn_forward.1} parent=0 // pred_check
    _
  $region7: #{gnn_forward.1} parent=0 // pred_check_branch
    %16 = sbr.rel (0) target = $region9
  $region8: #{gnn_forward.1} parent=0 // pred_region
    _
  $region9: #{gnn_forward.1} parent=0 // pred_fallthru
    _
  // Predicated region
  $region10: #{gnn_forward.1} parent=0 // pred_check
    _
  $region11: #{gnn_forward.1} parent=0 // pred_check_branch
    %18 = sbr.rel (0) target = $region13
  $region12: #{gnn_forward.1} parent=0 // pred_region
    _
  $region13: #{gnn_forward.1} parent=0 // pred_fallthru
    _
  // Predicated region
  $region14: #{gnn_forward.1} parent=0 // pred_check
    _
  $region15: #{gnn_forward.1} parent=0 // pred_check_branch
    %20 = sbr.rel (0) target = $region17
  $region16: #{gnn_forward.1} parent=0 // pred_region
    _
  $region17: #{gnn_forward.1} parent=0 // pred_fallthru
    _
  // Predicated region
  $region18: #{gnn_forward.1} parent=0 // pred_check
    _
  $region19: #{gnn_forward.1} parent=0 // pred_check_branch
    %22 = sbr.rel (0) target = $region21
  $region20: #{gnn_forward.1} parent=0 // pred_region
    _
  $region21: #{gnn_forward.1} parent=0 // pred_fallthru
    _
  // Predicated region
  $region22: #{gnn_forward.1} parent=0 // pred_check
    _
  $region23: #{gnn_forward.1} parent=0 // pred_check_branch
    %24 = sbr.rel (0) target = $region25
  $region24: #{gnn_forward.1} parent=0 // pred_region
    _
  $region25: #{gnn_forward.1} parent=0 // pred_fallthru
    _
  // Predicated region
  $region26: #{gnn_forward.1} parent=0 // pred_check
    _
  $region27: #{gnn_forward.1} parent=0 // pred_check_branch
    %26 = sbr.rel (0) target = $region29
  $region28: #{gnn_forward.1} parent=0 // pred_region
    _
  $region29: #{gnn_forward.1} parent=0 // pred_fallthru
    _
  // Predicated region
  $region30: #{gnn_forward.1} parent=0 // pred_check
    _
  $region31: #{gnn_forward.1} parent=0 // pred_check_branch
    %28 = sbr.rel (0) target = $region33
  $region32: #{gnn_forward.1} parent=0 // pred_region
    _
  $region33: #{gnn_forward.1} parent=0 // pred_fallthru
    _
  %v29 = vld [vmem:[%s0] sm:$0xf]
  %v30 = vld [vmem:[%s0 + $0x4] sm:$0xf]
  %v31 = vld [vmem:[%s0 + $0x8] sm:$0xf]
  %v32 = vld [vmem:[%s0 + $0xc] sm:$0xf]
  %v33 = vld [vmem:[%s0 + $0x10] sm:$0xf]
  %v34 = vld [vmem:[%s0 + $0x14] sm:$0xf]
  %v35 = vld [vmem:[%s0 + $0x18] sm:$0xf]
  %v36 = vld [vmem:[%s0 + $0x1c] sm:$0xf]
  %v37 = vld [vmem:[%s0 + $0x20] sm:$0xf]
  %v38 = vld [vmem:[%s0 + $0x24] sm:$0xf]
  %v39 = vld [vmem:[%s0 + $0x28] sm:$0xf]
  %v40 = vld [vmem:[%s0 + $0x2c] sm:$0xf]
  %v41 = vld [vmem:[%s0 + $0x30] sm:$0xf]
  %v42 = vld [vmem:[%s0 + $0x34] sm:$0xf]
  %v43 = vld [vmem:[%s0 + $0x38] sm:$0xf]
  %v44 = vld [vmem:[%s0 + $0x3c] sm:$0xf]
  %v45 = vld [vmem:[%s1] sm:$0xf]
  %v46 = vld [vmem:[%s1 + $0x4] sm:$0xf]
  %v47 = vld [vmem:[%s1 + $0x8] sm:$0xf]
  %v48 = vld [vmem:[%s1 + $0xc] sm:$0xf]
  %v49 = vld [vmem:[%s1 + $0x10] sm:$0xf]
  %v50 = vld [vmem:[%s1 + $0x14] sm:$0xf]
  %v51 = vld [vmem:[%s1 + $0x18] sm:$0xf]
  %v52 = vld [vmem:[%s1 + $0x1c] sm:$0xf]
  %v53 = vld [vmem:[%s1 + $0x20] sm:$0xf]
  %v54 = vld [vmem:[%s1 + $0x24] sm:$0xf]
  %v55 = vld [vmem:[%s1 + $0x28] sm:$0xf]
  %v56 = vld [vmem:[%s1 + $0x2c] sm:$0xf]
  %v57 = vld [vmem:[%s1 + $0x30] sm:$0xf]
  %v58 = vld [vmem:[%s1 + $0x34] sm:$0xf]
  %v59 = vld [vmem:[%s1 + $0x38] sm:$0xf]
  %v60 = vld [vmem:[%s1 + $0x3c] sm:$0xf]
  %v61 = vld [vmem:[%s2] sm:$0xf]
  %v62 = vld [vmem:[%s2 + $0x4] sm:$0xf]
  %v63 = vld [vmem:[%s2 + $0x8] sm:$0xf]
  %v64 = vld [vmem:[%s2 + $0xc] sm:$0xf]
  %v65 = vld [vmem:[%s2 + $0x10] sm:$0xf]
  %v66 = vld [vmem:[%s2 + $0x14] sm:$0xf]
  %v67 = vld [vmem:[%s2 + $0x18] sm:$0xf]
  %v68 = vld [vmem:[%s2 + $0x1c] sm:$0xf]
  %v69 = vld [vmem:[%s2 + $0x20] sm:$0xf]
  %v70 = vld [vmem:[%s2 + $0x24] sm:$0xf]
  %v71 = vld [vmem:[%s2 + $0x28] sm:$0xf]
  %v72 = vld [vmem:[%s2 + $0x2c] sm:$0xf]
  %v73 = vld [vmem:[%s2 + $0x30] sm:$0xf]
  %v74 = vld [vmem:[%s2 + $0x34] sm:$0xf]
  %v75 = vld [vmem:[%s2 + $0x38] sm:$0xf]
  %v76 = vld [vmem:[%s2 + $0x3c] sm:$0xf]
  %v93 = vunpack.c.l.b16 %v45
  %v94 = vunpack.c.l.b16 %v46
  %v95 = vunpack.c.l.b16 %v47
  %v96 = vunpack.c.l.b16 %v48
  %v97 = vunpack.c.l.b16 %v49
  %v98 = vunpack.c.l.b16 %v50
  %v99 = vunpack.c.l.b16 %v51
  %v100 = vunpack.c.l.b16 %v52
  %v101 = vunpack.c.l.b16 %v53
  %v102 = vunpack.c.l.b16 %v54
  %v103 = vunpack.c.l.b16 %v55
  %v104 = vunpack.c.l.b16 %v56
  %v105 = vunpack.c.l.b16 %v57
  %v106 = vunpack.c.l.b16 %v58
  %v107 = vunpack.c.l.b16 %v59
  %v108 = vunpack.c.l.b16 %v60
  %v109 = vpack.c.b16 %v94, %v93
  %v110 = vpack.c.b16 %v96, %v95
  %v111 = vpack.c.b16 %v98, %v97
  %v112 = vpack.c.b16 %v100, %v99
  %v113 = vpack.c.b16 %v102, %v101
  %v114 = vpack.c.b16 %v104, %v103
  %v115 = vpack.c.b16 %v106, %v105
  %v116 = vpack.c.b16 %v108, %v107
  %v141 = vunpack.c.l.b16 %v61
  %v142 = vunpack.c.l.b16 %v62
  %v143 = vunpack.c.l.b16 %v63
  %v144 = vunpack.c.l.b16 %v64
  %v145 = vunpack.c.l.b16 %v65
  %v146 = vunpack.c.l.b16 %v66
  %v147 = vunpack.c.l.b16 %v67
  %v148 = vunpack.c.l.b16 %v68
  %v149 = vunpack.c.l.b16 %v69
  %v150 = vunpack.c.l.b16 %v70
  %v151 = vunpack.c.l.b16 %v71
  %v152 = vunpack.c.l.b16 %v72
  %v153 = vunpack.c.l.b16 %v73
  %v154 = vunpack.c.l.b16 %v74
  %v155 = vunpack.c.l.b16 %v75
  %v156 = vunpack.c.l.b16 %v76
  %v157 = vpack.c.b16 %v142, %v141
  %v158 = vpack.c.b16 %v144, %v143
  %v159 = vpack.c.b16 %v146, %v145
  %v160 = vpack.c.b16 %v148, %v147
  %v161 = vpack.c.b16 %v150, %v149
  %v162 = vpack.c.b16 %v152, %v151
  %v163 = vpack.c.b16 %v154, %v153
  %v164 = vpack.c.b16 %v156, %v155
  %173 = vmatpush.bf16.msra.mxu0 %v164
  %174 = vmatpush.bf16.msra.mxu0 %v163
  %175 = vmatpush.bf16.msra.mxu0 %v162
  %176 = vmatpush.bf16.msra.mxu0 %v161
  %177 = vmatpush.bf16.msra.mxu0 %v160
  %178 = vmatpush.bf16.msra.mxu0 %v159
  %179 = vmatpush.bf16.msra.mxu0 %v158
  %180 = vmatpush.bf16.msra.mxu0 %v157
  %181 = vmatmul.bf16.gmra.mxu0 %v109
  %v182 = vpop.f32.mrf.mxu0
  %v183 = vadd.f32 0.0, %v182
  %v184 = vpop.f32.mrf.mxu0
  %v185 = vadd.f32 0.0, %v184
  %186 = vmatmul.bf16.gmra.mxu0 %v110
  %v187 = vpop.f32.mrf.mxu0
  %v188 = vadd.f32 0.0, %v187
  %v189 = vpop.f32.mrf.mxu0
  %v190 = vadd.f32 0.0, %v189
  %191 = vmatmul.bf16.gmra.mxu0 %v111
  %v192 = vpop.f32.mrf.mxu0
  %v193 = vadd.f32 0.0, %v192
  %v194 = vpop.f32.mrf.mxu0
  %v195 = vadd.f32 0.0, %v194
  %196 = vmatmul.bf16.gmra.mxu0 %v112
  %v197 = vpop.f32.mrf.mxu0
  %v198 = vadd.f32 0.0, %v197
  %v199 = vpop.f32.mrf.mxu0
  %v200 = vadd.f32 0.0, %v199
  %201 = vmatmul.bf16.gmra.mxu0 %v113
  %v202 = vpop.f32.mrf.mxu0
  %v203 = vadd.f32 0.0, %v202
  %v204 = vpop.f32.mrf.mxu0
  %v205 = vadd.f32 0.0, %v204
  %206 = vmatmul.bf16.gmra.mxu0 %v114
  %v207 = vpop.f32.mrf.mxu0
  %v208 = vadd.f32 0.0, %v207
  %v209 = vpop.f32.mrf.mxu0
  %v210 = vadd.f32 0.0, %v209
  %211 = vmatmul.bf16.gmra.mxu0 %v115
  %v212 = vpop.f32.mrf.mxu0
  %v213 = vadd.f32 0.0, %v212
  %v214 = vpop.f32.mrf.mxu0
  %v215 = vadd.f32 0.0, %v214
  %216 = vmatmul.bf16.gmra.mxu0 %v116
  %v217 = vpop.f32.mrf.mxu0
  %v218 = vadd.f32 0.0, %v217
  %v219 = vpop.f32.mrf.mxu0
  %v220 = vadd.f32 0.0, %v219
  %221 = vdwg.mxu0
  %v222 = vpack.c.bf16 %v185, %v183
  %v223 = vpack.c.bf16 %v190, %v188
  %v224 = vpack.c.bf16 %v195, %v193
  %v225 = vpack.c.bf16 %v200, %v198
  %v226 = vpack.c.bf16 %v205, %v203
  %v227 = vpack.c.bf16 %v210, %v208
  %v228 = vpack.c.bf16 %v215, %v213
  %v229 = vpack.c.bf16 %v220, %v218
  %v230 = vld [vmem:[%s3] sm:$0x1]
  %v232 = vperm.slane %v230, 0
  %v250 = vunpack.c.l.b16 %v29
  %v251 = vunpack.c.l.b16 %v30
  %v252 = vunpack.c.l.b16 %v31
  %v253 = vunpack.c.l.b16 %v32
  %v254 = vunpack.c.l.b16 %v33
  %v255 = vunpack.c.l.b16 %v34
  %v256 = vunpack.c.l.b16 %v35
  %v257 = vunpack.c.l.b16 %v36
  %v258 = vunpack.c.l.b16 %v37
  %v259 = vunpack.c.l.b16 %v38
  %v260 = vunpack.c.l.b16 %v39
  %v261 = vunpack.c.l.b16 %v40
  %v262 = vunpack.c.l.b16 %v41
  %v263 = vunpack.c.l.b16 %v42
  %v264 = vunpack.c.l.b16 %v43
  %v265 = vunpack.c.l.b16 %v44
  %v266 = vpack.c.b16 %v251, %v250
  %v267 = vpack.c.b16 %v253, %v252
  %v268 = vpack.c.b16 %v255, %v254
  %v269 = vpack.c.b16 %v257, %v256
  %v270 = vpack.c.b16 %v259, %v258
  %v271 = vpack.c.b16 %v261, %v260
  %v272 = vpack.c.b16 %v263, %v262
  %v273 = vpack.c.b16 %v265, %v264
  %282 = vmatpush.bf16.msra.mxu0 %v229
  %283 = vmatpush.bf16.msra.mxu0 %v228
  %284 = vmatpush.bf16.msra.mxu0 %v227
  %285 = vmatpush.bf16.msra.mxu0 %v226
  %286 = vmatpush.bf16.msra.mxu0 %v225
  %287 = vmatpush.bf16.msra.mxu0 %v224
  %288 = vmatpush.bf16.msra.mxu0 %v223
  %289 = vmatpush.bf16.msra.mxu0 %v222
  %290 = vmatmul.bf16.gmra.mxu0 %v266
  %v291 = vpop.f32.mrf.mxu0
  %v292 = vadd.f32 %v232, %v291
  %v293 = vpop.f32.mrf.mxu0
  %v294 = vadd.f32 %v232, %v293
  %295 = vmatmul.bf16.gmra.mxu0 %v267
  %v296 = vpop.f32.mrf.mxu0
  %v297 = vadd.f32 %v232, %v296
  %v298 = vpop.f32.mrf.mxu0
  %v299 = vadd.f32 %v232, %v298
  %300 = vmatmul.bf16.gmra.mxu0 %v268
  %v301 = vpop.f32.mrf.mxu0
  %v302 = vadd.f32 %v232, %v301
  %v303 = vpop.f32.mrf.mxu0
  %v304 = vadd.f32 %v232, %v303
  %305 = vmatmul.bf16.gmra.mxu0 %v269
  %v306 = vpop.f32.mrf.mxu0
  %v307 = vadd.f32 %v232, %v306
  %v308 = vpop.f32.mrf.mxu0
  %v309 = vadd.f32 %v232, %v308
  %310 = vmatmul.bf16.gmra.mxu0 %v270
  %v311 = vpop.f32.mrf.mxu0
  %v312 = vadd.f32 %v232, %v311
  %v313 = vpop.f32.mrf.mxu0
  %v314 = vadd.f32 %v232, %v313
  %315 = vmatmul.bf16.gmra.mxu0 %v271
  %v316 = vpop.f32.mrf.mxu0
  %v317 = vadd.f32 %v232, %v316
  %v318 = vpop.f32.mrf.mxu0
  %v319 = vadd.f32 %v232, %v318
  %320 = vmatmul.bf16.gmra.mxu0 %v272
  %v321 = vpop.f32.mrf.mxu0
  %v322 = vadd.f32 %v232, %v321
  %v323 = vpop.f32.mrf.mxu0
  %v324 = vadd.f32 %v232, %v323
  %325 = vmatmul.bf16.gmra.mxu0 %v273
  %v326 = vpop.f32.mrf.mxu0
  %v327 = vadd.f32 %v232, %v326
  %v328 = vpop.f32.mrf.mxu0
  %v329 = vadd.f32 %v232, %v328
  %330 = vdwg.mxu0
  %v331 = vmax.f32 %v292, 0.0
  %v332 = vmax.f32 %v294, 0.0
  %v333 = vmax.f32 %v297, 0.0
  %v334 = vmax.f32 %v299, 0.0
  %v335 = vmax.f32 %v302, 0.0
  %v336 = vmax.f32 %v304, 0.0
  %v337 = vmax.f32 %v307, 0.0
  %v338 = vmax.f32 %v309, 0.0
  %v339 = vmax.f32 %v312, 0.0
  %v340 = vmax.f32 %v314, 0.0
  %v341 = vmax.f32 %v317, 0.0
  %v342 = vmax.f32 %v319, 0.0
  %v343 = vmax.f32 %v322, 0.0
  %v344 = vmax.f32 %v324, 0.0
  %v345 = vmax.f32 %v327, 0.0
  %v346 = vmax.f32 %v329, 0.0
  %v347 = vpack.c.bf16 %v332, %v331
  %v348 = vpack.c.bf16 %v334, %v333
  %v349 = vpack.c.bf16 %v336, %v335
  %v350 = vpack.c.bf16 %v338, %v337
  %v351 = vpack.c.bf16 %v340, %v339
  %v352 = vpack.c.bf16 %v342, %v341
  %v353 = vpack.c.bf16 %v344, %v343
  %v354 = vpack.c.bf16 %v346, %v345
  %v355 = vld [vmem:[%s4] sm:$0xf]
  %v356 = vld [vmem:[%s4 + $0x4] sm:$0xf]
  %v357 = vld [vmem:[%s4 + $0x8] sm:$0xf]
  %v358 = vld [vmem:[%s4 + $0xc] sm:$0xf]
  %v359 = vld [vmem:[%s4 + $0x10] sm:$0xf]
  %v360 = vld [vmem:[%s4 + $0x14] sm:$0xf]
  %v361 = vld [vmem:[%s4 + $0x18] sm:$0xf]
  %v362 = vld [vmem:[%s4 + $0x1c] sm:$0xf]
  %v363 = vld [vmem:[%s4 + $0x20] sm:$0xf]
  %v364 = vld [vmem:[%s4 + $0x24] sm:$0xf]
  %v365 = vld [vmem:[%s4 + $0x28] sm:$0xf]
  %v366 = vld [vmem:[%s4 + $0x2c] sm:$0xf]
  %v367 = vld [vmem:[%s4 + $0x30] sm:$0xf]
  %v368 = vld [vmem:[%s4 + $0x34] sm:$0xf]
  %v369 = vld [vmem:[%s4 + $0x38] sm:$0xf]
  %v370 = vld [vmem:[%s4 + $0x3c] sm:$0xf]
  %v387 = vunpack.c.l.b16 %v355
  %v388 = vunpack.c.l.b16 %v356
  %v389 = vunpack.c.l.b16 %v357
  %v390 = vunpack.c.l.b16 %v358
  %v391 = vunpack.c.l.b16 %v359
  %v392 = vunpack.c.l.b16 %v360
  %v393 = vunpack.c.l.b16 %v361
  %v394 = vunpack.c.l.b16 %v362
  %v395 = vunpack.c.l.b16 %v363
  %v396 = vunpack.c.l.b16 %v364
  %v397 = vunpack.c.l.b16 %v365
  %v398 = vunpack.c.l.b16 %v366
  %v399 = vunpack.c.l.b16 %v367
  %v400 = vunpack.c.l.b16 %v368
  %v401 = vunpack.c.l.b16 %v369
  %v402 = vunpack.c.l.b16 %v370
  %v403 = vpack.c.b16 %v388, %v387
  %v404 = vpack.c.b16 %v390, %v389
  %v405 = vpack.c.b16 %v392, %v391
  %v406 = vpack.c.b16 %v394, %v393
  %v407 = vpack.c.b16 %v396, %v395
  %v408 = vpack.c.b16 %v398, %v397
  %v409 = vpack.c.b16 %v400, %v399
  %v410 = vpack.c.b16 %v402, %v401
  %419 = vmatpush.bf16.msra.mxu0 %v410
  %420 = vmatpush.bf16.msra.mxu0 %v409
  %421 = vmatpush.bf16.msra.mxu0 %v408
  %422 = vmatpush.bf16.msra.mxu0 %v407
  %423 = vmatpush.bf16.msra.mxu0 %v406
  %424 = vmatpush.bf16.msra.mxu0 %v405
  %425 = vmatpush.bf16.msra.mxu0 %v404
  %426 = vmatpush.bf16.msra.mxu0 %v403
  %427 = vmatmul.bf16.gmra.mxu0 %v347
  %v428 = vpop.f32.mrf.mxu0
  %v429 = vadd.f32 0.0, %v428
  %v430 = vpop.f32.mrf.mxu0
  %v431 = vadd.f32 0.0, %v430
  %432 = vmatmul.bf16.gmra.mxu0 %v348
  %v433 = vpop.f32.mrf.mxu0
  %v434 = vadd.f32 0.0, %v433
  %v435 = vpop.f32.mrf.mxu0
  %v436 = vadd.f32 0.0, %v435
  %437 = vmatmul.bf16.gmra.mxu0 %v349
  %v438 = vpop.f32.mrf.mxu0
  %v439 = vadd.f32 0.0, %v438
  %v440 = vpop.f32.mrf.mxu0
  %v441 = vadd.f32 0.0, %v440
  %442 = vmatmul.bf16.gmra.mxu0 %v350
  %v443 = vpop.f32.mrf.mxu0
  %v444 = vadd.f32 0.0, %v443
  %v445 = vpop.f32.mrf.mxu0
  %v446 = vadd.f32 0.0, %v445
  %447 = vmatmul.bf16.gmra.mxu0 %v351
  %v448 = vpop.f32.mrf.mxu0
  %v449 = vadd.f32 0.0, %v448
  %v450 = vpop.f32.mrf.mxu0
  %v451 = vadd.f32 0.0, %v450
  %452 = vmatmul.bf16.gmra.mxu0 %v352
  %v453 = vpop.f32.mrf.mxu0
  %v454 = vadd.f32 0.0, %v453
  %v455 = vpop.f32.mrf.mxu0
  %v456 = vadd.f32 0.0, %v455
  %457 = vmatmul.bf16.gmra.mxu0 %v353
  %v458 = vpop.f32.mrf.mxu0
  %v459 = vadd.f32 0.0, %v458
  %v460 = vpop.f32.mrf.mxu0
  %v461 = vadd.f32 0.0, %v460
  %462 = vmatmul.bf16.gmra.mxu0 %v354
  %v463 = vpop.f32.mrf.mxu0
  %v464 = vadd.f32 0.0, %v463
  %v465 = vpop.f32.mrf.mxu0
  %v466 = vadd.f32 0.0, %v465
  %467 = vdwg.mxu0
  %v468 = vpack.c.bf16 %v431, %v429
  %v469 = vpack.c.bf16 %v436, %v434
  %v470 = vpack.c.bf16 %v441, %v439
  %v471 = vpack.c.bf16 %v446, %v444
  %v472 = vpack.c.bf16 %v451, %v449
  %v473 = vpack.c.bf16 %v456, %v454
  %v474 = vpack.c.bf16 %v461, %v459
  %v475 = vpack.c.bf16 %v466, %v464
  %v476 = vld [vmem:[%s5] sm:$0x1]
  %v478 = vperm.slane %v476, 0
  %480 = vmatpush.bf16.msra.mxu0 %v475
  %481 = vmatpush.bf16.msra.mxu0 %v474
  %482 = vmatpush.bf16.msra.mxu0 %v473
  %483 = vmatpush.bf16.msra.mxu0 %v472
  %484 = vmatpush.bf16.msra.mxu0 %v471
  %485 = vmatpush.bf16.msra.mxu0 %v470
  %486 = vmatpush.bf16.msra.mxu0 %v469
  %487 = vmatpush.bf16.msra.mxu0 %v468
  %488 = vmatmul.bf16.gmra.mxu0 %v266
  %v489 = vpop.f32.mrf.mxu0
  %v490 = vadd.f32 %v478, %v489
  %v491 = vpop.f32.mrf.mxu0
  %v492 = vadd.f32 %v478, %v491
  %493 = vmatmul.bf16.gmra.mxu0 %v267
  %v494 = vpop.f32.mrf.mxu0
  %v495 = vadd.f32 %v478, %v494
  %v496 = vpop.f32.mrf.mxu0
  %v497 = vadd.f32 %v478, %v496
  %498 = vmatmul.bf16.gmra.mxu0 %v268
  %v499 = vpop.f32.mrf.mxu0
  %v500 = vadd.f32 %v478, %v499
  %v501 = vpop.f32.mrf.mxu0
  %v502 = vadd.f32 %v478, %v501
  %503 = vmatmul.bf16.gmra.mxu0 %v269
  %v504 = vpop.f32.mrf.mxu0
  %v505 = vadd.f32 %v478, %v504
  %v506 = vpop.f32.mrf.mxu0
  %v507 = vadd.f32 %v478, %v506
  %508 = vmatmul.bf16.gmra.mxu0 %v270
  %v509 = vpop.f32.mrf.mxu0
  %v510 = vadd.f32 %v478, %v509
  %v511 = vpop.f32.mrf.mxu0
  %v512 = vadd.f32 %v478, %v511
  %513 = vmatmul.bf16.gmra.mxu0 %v271
  %v514 = vpop.f32.mrf.mxu0
  %v515 = vadd.f32 %v478, %v514
  %v516 = vpop.f32.mrf.mxu0
  %v517 = vadd.f32 %v478, %v516
  %518 = vmatmul.bf16.gmra.mxu0 %v272
  %v519 = vpop.f32.mrf.mxu0
  %v520 = vadd.f32 %v478, %v519
  %v521 = vpop.f32.mrf.mxu0
  %v522 = vadd.f32 %v478, %v521
  %523 = vmatmul.bf16.gmra.mxu0 %v273
  %v524 = vpop.f32.mrf.mxu0
  %v525 = vadd.f32 %v478, %v524
  %v526 = vpop.f32.mrf.mxu0
  %v527 = vadd.f32 %v478, %v526
  %528 = vdwg.mxu0
  %v529 = vmax.f32 %v490, 0.0
  %v530 = vmax.f32 %v492, 0.0
  %v531 = vmax.f32 %v495, 0.0
  %v532 = vmax.f32 %v497, 0.0
  %v533 = vmax.f32 %v500, 0.0
  %v534 = vmax.f32 %v502, 0.0
  %v535 = vmax.f32 %v505, 0.0
  %v536 = vmax.f32 %v507, 0.0
  %v537 = vmax.f32 %v510, 0.0
  %v538 = vmax.f32 %v512, 0.0
  %v539 = vmax.f32 %v515, 0.0
  %v540 = vmax.f32 %v517, 0.0
  %v541 = vmax.f32 %v520, 0.0
  %v542 = vmax.f32 %v522, 0.0
  %v543 = vmax.f32 %v525, 0.0
  %v544 = vmax.f32 %v527, 0.0
  %v545 = vpack.c.bf16 %v530, %v529
  %v546 = vpack.c.bf16 %v532, %v531
  %v547 = vpack.c.bf16 %v534, %v533
  %v548 = vpack.c.bf16 %v536, %v535
  %v549 = vpack.c.bf16 %v538, %v537
  %v550 = vpack.c.bf16 %v540, %v539
  %v551 = vpack.c.bf16 %v542, %v541
  %v552 = vpack.c.bf16 %v544, %v543
  %v553 = vld [vmem:[%s6] sm:$0xf]
  %v554 = vld [vmem:[%s6 + $0x4] sm:$0xf]
  %v555 = vld [vmem:[%s6 + $0x8] sm:$0xf]
  %v556 = vld [vmem:[%s6 + $0xc] sm:$0xf]
  %v557 = vld [vmem:[%s6 + $0x10] sm:$0xf]
  %v558 = vld [vmem:[%s6 + $0x14] sm:$0xf]
  %v559 = vld [vmem:[%s6 + $0x18] sm:$0xf]
  %v560 = vld [vmem:[%s6 + $0x1c] sm:$0xf]
  %v561 = vld [vmem:[%s6 + $0x20] sm:$0xf]
  %v562 = vld [vmem:[%s6 + $0x24] sm:$0xf]
  %v563 = vld [vmem:[%s6 + $0x28] sm:$0xf]
  %v564 = vld [vmem:[%s6 + $0x2c] sm:$0xf]
  %v565 = vld [vmem:[%s6 + $0x30] sm:$0xf]
  %v566 = vld [vmem:[%s6 + $0x34] sm:$0xf]
  %v567 = vld [vmem:[%s6 + $0x38] sm:$0xf]
  %v568 = vld [vmem:[%s6 + $0x3c] sm:$0xf]
  %v585 = vunpack.c.l.b16 %v553
  %v586 = vunpack.c.l.b16 %v554
  %v587 = vunpack.c.l.b16 %v555
  %v588 = vunpack.c.l.b16 %v556
  %v589 = vunpack.c.l.b16 %v557
  %v590 = vunpack.c.l.b16 %v558
  %v591 = vunpack.c.l.b16 %v559
  %v592 = vunpack.c.l.b16 %v560
  %v593 = vunpack.c.l.b16 %v561
  %v594 = vunpack.c.l.b16 %v562
  %v595 = vunpack.c.l.b16 %v563
  %v596 = vunpack.c.l.b16 %v564
  %v597 = vunpack.c.l.b16 %v565
  %v598 = vunpack.c.l.b16 %v566
  %v599 = vunpack.c.l.b16 %v567
  %v600 = vunpack.c.l.b16 %v568
  %v601 = vpack.c.b16 %v586, %v585
  %v602 = vpack.c.b16 %v588, %v587
  %v603 = vpack.c.b16 %v590, %v589
  %v604 = vpack.c.b16 %v592, %v591
  %v605 = vpack.c.b16 %v594, %v593
  %v606 = vpack.c.b16 %v596, %v595
  %v607 = vpack.c.b16 %v598, %v597
  %v608 = vpack.c.b16 %v600, %v599
  %617 = vmatpush.bf16.msra.mxu0 %v608
  %618 = vmatpush.bf16.msra.mxu0 %v607
  %619 = vmatpush.bf16.msra.mxu0 %v606
  %620 = vmatpush.bf16.msra.mxu0 %v605
  %621 = vmatpush.bf16.msra.mxu0 %v604
  %622 = vmatpush.bf16.msra.mxu0 %v603
  %623 = vmatpush.bf16.msra.mxu0 %v602
  %624 = vmatpush.bf16.msra.mxu0 %v601
  %625 = vmatmul.bf16.gmra.mxu0 %v545
  %v626 = vpop.f32.mrf.mxu0
  %v627 = vadd.f32 0.0, %v626
  %v628 = vpop.f32.mrf.mxu0
  %v629 = vadd.f32 0.0, %v628
  %630 = vmatmul.bf16.gmra.mxu0 %v546
  %v631 = vpop.f32.mrf.mxu0
  %v632 = vadd.f32 0.0, %v631
  %v633 = vpop.f32.mrf.mxu0
  %v634 = vadd.f32 0.0, %v633
  %635 = vmatmul.bf16.gmra.mxu0 %v547
  %v636 = vpop.f32.mrf.mxu0
  %v637 = vadd.f32 0.0, %v636
  %v638 = vpop.f32.mrf.mxu0
  %v639 = vadd.f32 0.0, %v638
  %640 = vmatmul.bf16.gmra.mxu0 %v548
  %v641 = vpop.f32.mrf.mxu0
  %v642 = vadd.f32 0.0, %v641
  %v643 = vpop.f32.mrf.mxu0
  %v644 = vadd.f32 0.0, %v643
  %645 = vmatmul.bf16.gmra.mxu0 %v549
  %v646 = vpop.f32.mrf.mxu0
  %v647 = vadd.f32 0.0, %v646
  %v648 = vpop.f32.mrf.mxu0
  %v649 = vadd.f32 0.0, %v648
  %650 = vmatmul.bf16.gmra.mxu0 %v550
  %v651 = vpop.f32.mrf.mxu0
  %v652 = vadd.f32 0.0, %v651
  %v653 = vpop.f32.mrf.mxu0
  %v654 = vadd.f32 0.0, %v653
  %655 = vmatmul.bf16.gmra.mxu0 %v551
  %v656 = vpop.f32.mrf.mxu0
  %v657 = vadd.f32 0.0, %v656
  %v658 = vpop.f32.mrf.mxu0
  %v659 = vadd.f32 0.0, %v658
  %660 = vmatmul.bf16.gmra.mxu0 %v552
  %v661 = vpop.f32.mrf.mxu0
  %v662 = vadd.f32 0.0, %v661
  %v663 = vpop.f32.mrf.mxu0
  %v664 = vadd.f32 0.0, %v663
  %665 = vdwg.mxu0
  %v666 = vpack.c.bf16 %v629, %v627
  %v667 = vpack.c.bf16 %v634, %v632
  %v668 = vpack.c.bf16 %v639, %v637
  %v669 = vpack.c.bf16 %v644, %v642
  %v670 = vpack.c.bf16 %v649, %v647
  %v671 = vpack.c.bf16 %v654, %v652
  %v672 = vpack.c.bf16 %v659, %v657
  %v673 = vpack.c.bf16 %v664, %v662
  %v674 = vld [vmem:[%s7] sm:$0x1]
  %v676 = vperm.slane %v674, 0
  %678 = vmatpush.bf16.msra.mxu0 %v673
  %679 = vmatpush.bf16.msra.mxu0 %v672
  %680 = vmatpush.bf16.msra.mxu0 %v671
  %681 = vmatpush.bf16.msra.mxu0 %v670
  %682 = vmatpush.bf16.msra.mxu0 %v669
  %683 = vmatpush.bf16.msra.mxu0 %v668
  %684 = vmatpush.bf16.msra.mxu0 %v667
  %685 = vmatpush.bf16.msra.mxu0 %v666
  %686 = vmatmul.bf16.gmra.mxu0 %v266
  %v687 = vpop.f32.mrf.mxu0
  %v688 = vadd.f32 %v676, %v687
  %v689 = vpop.f32.mrf.mxu0
  %v690 = vadd.f32 %v676, %v689
  %691 = vmatmul.bf16.gmra.mxu0 %v267
  %v692 = vpop.f32.mrf.mxu0
  %v693 = vadd.f32 %v676, %v692
  %v694 = vpop.f32.mrf.mxu0
  %v695 = vadd.f32 %v676, %v694
  %696 = vmatmul.bf16.gmra.mxu0 %v268
  %v697 = vpop.f32.mrf.mxu0
  %v698 = vadd.f32 %v676, %v697
  %v699 = vpop.f32.mrf.mxu0
  %v700 = vadd.f32 %v676, %v699
  %701 = vmatmul.bf16.gmra.mxu0 %v269
  %v702 = vpop.f32.mrf.mxu0
  %v703 = vadd.f32 %v676, %v702
  %v704 = vpop.f32.mrf.mxu0
  %v705 = vadd.f32 %v676, %v704
  %706 = vmatmul.bf16.gmra.mxu0 %v270
  %v707 = vpop.f32.mrf.mxu0
  %v708 = vadd.f32 %v676, %v707
  %v709 = vpop.f32.mrf.mxu0
  %v710 = vadd.f32 %v676, %v709
  %711 = vmatmul.bf16.gmra.mxu0 %v271
  %v712 = vpop.f32.mrf.mxu0
  %v713 = vadd.f32 %v676, %v712
  %v714 = vpop.f32.mrf.mxu0
  %v715 = vadd.f32 %v676, %v714
  %716 = vmatmul.bf16.gmra.mxu0 %v272
  %v717 = vpop.f32.mrf.mxu0
  %v718 = vadd.f32 %v676, %v717
  %v719 = vpop.f32.mrf.mxu0
  %v720 = vadd.f32 %v676, %v719
  %721 = vmatmul.bf16.gmra.mxu0 %v273
  %v722 = vpop.f32.mrf.mxu0
  %v723 = vadd.f32 %v676, %v722
  %v724 = vpop.f32.mrf.mxu0
  %v725 = vadd.f32 %v676, %v724
  %726 = vdwg.mxu0
  %727 = vst [vmem:[%s8] sm:$0xff] %v688
  %728 = vst [vmem:[%s8 + $0x8] sm:$0xff] %v690
  %729 = vst [vmem:[%s8 + $0x10] sm:$0xff] %v693
  %730 = vst [vmem:[%s8 + $0x18] sm:$0xff] %v695
  %731 = vst [vmem:[%s8 + $0x20] sm:$0xff] %v698
  %732 = vst [vmem:[%s8 + $0x28] sm:$0xff] %v700
  %733 = vst [vmem:[%s8 + $0x30] sm:$0xff] %v703
  %734 = vst [vmem:[%s8 + $0x38] sm:$0xff] %v705
  %735 = vst [vmem:[%s8 + $0x40] sm:$0xff] %v708
  %736 = vst [vmem:[%s8 + $0x48] sm:$0xff] %v710
  %737 = vst [vmem:[%s8 + $0x50] sm:$0xff] %v713
  %738 = vst [vmem:[%s8 + $0x58] sm:$0xff] %v715
  %739 = vst [vmem:[%s8 + $0x60] sm:$0xff] %v718
  %740 = vst [vmem:[%s8 + $0x68] sm:$0xff] %v720
  %741 = vst [vmem:[%s8 + $0x70] sm:$0xff] %v723
  %742 = vst [vmem:[%s8 + $0x78] sm:$0xff] %v725
  // Predicated region
  $region34: #{gnn_forward.1} parent=0 // pred_check
    _
  $region35: #{gnn_forward.1} parent=0 // pred_check_branch
    %744 = sbr.rel (0) target = $region37
  $region36: #{gnn_forward.1} parent=0 // pred_region
    _
  $region37: #{gnn_forward.1} parent=0 // pred_fallthru
    _
  // Predicated region
  $region38: #{gnn_forward.1} parent=0 // pred_check
    _
  $region39: #{gnn_forward.1} parent=0 // pred_check_branch
    %746 = sbr.rel (0) target = $region41
  $region40: #{gnn_forward.1} parent=0 // pred_region
    _
  $region41: #{gnn_forward.1} parent=0 // pred_fallthru
    _

</llo_original>
